<compile_context>
chip_gen: v7x
topology: tpu7x:2x2x1
jax: 0.10.0
libtpu: 0.0.40
codegen_flags: <defaults>
</compile_context>

<pallas_src>
import jax
import jax.numpy as jnp
from jax.experimental import pallas as pl
from jax.experimental.pallas import tpu as pltpu


def _tanh_kernel(x_ref, o_ref):
    # Elementwise tanh on the whole VMEM tile (EUP transcendental path).
    # Upcast to f32 so bf16/f16 inputs match an f32-computed reference; this
    # is free here since the kernel is memory bound, not compute bound.
    x = x_ref[...]
    o_ref[...] = jnp.tanh(x.astype(jnp.float32)).astype(o_ref.dtype)


def _round_up(v: int, m: int) -> int:
    return ((v + m - 1) // m) * m


def tanh_pallas(
    x: jax.Array,
    *,
    block_bytes: int = 2 * 1024 * 1024,
    donate_input: bool = False,
) -> jax.Array:
    """Elementwise tanh via a Pallas TPU kernel. Works for any input shape."""
    orig_shape = x.shape
    orig_dtype = x.dtype
    n = x.size
    if n == 0:
        return x

    itemsize = jnp.dtype(orig_dtype).itemsize

    # Widest lane-dense width (multiple of 128) that divides the element
    # count -> reshape is a free bitcast, no pad copy needed.
    width = None
    for w in (1024, 512, 256, 128):
        if n % w == 0:
            width = w
            break

    if width is None:
        # Odd total size: pad up to an (8 * 1024)-aligned slab. This is the
        # only path that pays a whole-array copy.
        width = 1024
        total = _round_up(n, 8 * width)
        x_flat = jnp.pad(jnp.ravel(x), (0, total - n))
        padded = True
    else:
        total = n
        x_flat = jnp.ravel(x)
        padded = False

    rows = total // width

    # Rows per block targeting ~block_bytes per block (multiple of 8 sublanes).
    # 4x block (input + output, double-buffered) stays under the 16 MiB v5e
    # default scoped-VMEM budget, so no vmem_limit_bytes override is needed.
    target_rows = max(8, (block_bytes // (width * itemsize)) // 8 * 8)

    if rows <= target_rows:
        tile_rows = rows
        # Keep at least 2 grid steps when there is enough work so the
        # "parallel" grid axis can use both v7x TensorCores.
        if rows >= 16:
            tile_rows = _round_up(pl.cdiv(rows, 2), 8)
    else:
        tile_rows = target_rows

    grid = (pl.cdiv(rows, tile_rows),)

    x2d = x_flat.reshape(rows, width)

    out2d = pl.pallas_call(
        _tanh_kernel,
        out_shape=jax.ShapeDtypeStruct((rows, width), orig_dtype),
        grid_spec=pltpu.PrefetchScalarGridSpec(
            num_scalar_prefetch=0,
            grid=grid,
            in_specs=[pl.BlockSpec((tile_rows, width), lambda i: (i, 0))],
            out_specs=pl.BlockSpec((tile_rows, width), lambda i: (i, 0)),
        ),
        compiler_params=pltpu.CompilerParams(
            dimension_semantics=("parallel",),
        ),
        input_output_aliases=({0: 0} if donate_input else {}),
    )(x2d)

    if padded:
        return out2d.reshape(-1)[:n].reshape(orig_shape)
    return out2d.reshape(orig_shape)


if __name__ == "__main__":
    key = jax.random.PRNGKey(0)

    # Main check: small shape consistent with a generic activation-layer input.
    x = jax.random.normal(key, (2, 4, 16, 16), dtype=jnp.float32)
    y = tanh_pallas(x)
    jax.block_until_ready(y)
    y_ref = jnp.tanh(x)
    assert y.shape == x.shape and y.dtype == x.dtype
    assert jnp.allclose(y, y_ref, atol=1e-6, rtol=1e-6)

    # Odd-size input (exercises the padded fallback path).
    k2, _ = jax.random.split(key)
    x_odd = jax.random.normal(k2, (3, 5, 7), dtype=jnp.float32)
    y_odd = tanh_pallas(x_odd)
    jax.block_until_ready(y_odd)
    assert y_odd.shape == x_odd.shape and y_odd.dtype == x_odd.dtype
    assert jnp.allclose(y_odd, jnp.tanh(x_odd), atol=1e-6, rtol=1e-6)

    print("KERNEL_OK")
</pallas_src>

<mosaic_0001>
module attributes {stable_mosaic.version = 11 : i64} {
  func.func @_tanh_kernel(%arg0: i32, %arg1: memref<2x1024xf32, #tpu.memory_space<vmem>>, %arg2: memref<2x1024xf32, #tpu.memory_space<vmem>>) attributes {dimension_semantics = [#tpu.dimension_semantics<parallel>], iteration_bounds = array<i64: 1>, scalar_prefetch = 0 : i64, scratch_operands = 0 : i64, tpu.core_type = #tpu.core_type<tc>, window_params = [{transform_indices = @transform_0, window_bounds = array<i64: 2, 1024>}, {transform_indices = @transform_1, window_bounds = array<i64: 2, 1024>}]} {
    %c0 = arith.constant 0 : index
    %c0_0 = arith.constant 0 : index
    %0 = vector.load %arg1[%c0, %c0_0] : memref<2x1024xf32, #tpu.memory_space<vmem>>, vector<2x1024xf32>
    %1 = math.tanh %0 : vector<2x1024xf32>
    %c0_1 = arith.constant 0 : index
    %c0_2 = arith.constant 0 : index
    %2 = vector.load %arg2[%c0_1, %c0_2] : memref<2x1024xf32, #tpu.memory_space<vmem>>, vector<2x1024xf32>
    tpu.vector_store %arg2[%c0_1, %c0_2], %1 {strides = array<i32>} : memref<2x1024xf32, #tpu.memory_space<vmem>>, vector<2x1024xf32>,
    return
  }
  func.func @transform_0(%arg0: i32) -> (i32, i32) {
    %c0_i32 = arith.constant 0 : i32
    %c0_i32_0 = arith.constant 0 : i32
    return %arg0, %c0_i32 : i32, i32
  }
  func.func @transform_1(%arg0: i32) -> (i32, i32) {
    %c0_i32 = arith.constant 0 : i32
    %c0_i32_0 = arith.constant 0 : i32
    return %arg0, %c0_i32 : i32, i32
  }
}

</mosaic_0001>

<llo_original>
// kernel: tpu_custom_call.1
$region0: #{tpu_custom_call.1}
  #allocation0 [shape = 'u32[]', space=smem, size = 0x4, offset = 0x4, fixed_abs, tag = 'smem constant byte address 0x4 - core index']
  #allocation1 [shape = 'u32[144,128]{1,0:T(1,128)}', space=vmem, size = 0x12000, scoped, tag = 'internal scratch']
  %s0 = inlined_call_operand.hbm [shape: f32[2,1024], index: 0, kind: input, shape index: {}]
  %s1 = inlined_call_operand.hbm [shape: f32[2,1024], index: 1, kind: output, shape index: {}]
  %s2 = sld [smem:[#allocation0]]
  $region18: #{tpu_custom_call.1} parent=0
    _
  %s4 = ssub.s32 1, %s2
  %s5 = scalar_select 0, %s4, %s2
  $region1: #{tpu_custom_call.1} parent=0
    #allocation2 [shape = 'u8[8192]{0}', space=vmem, size = 0x2000, scoped, tag = 'input window, operand 0, single buffered']
    #allocation3 [shape = 's32[1]{0}', space=sflag, size = 0x4, scoped, tag = 'scoped memory for tpu_custom_call.1']
    #allocation4 [shape = 's32[1]{0}', space=sflag, size = 0x4, scoped, tag = 'scoped memory for tpu_custom_call.1']
    #allocation5 [shape = 'u8[8192]{0}', space=vmem, size = 0x2000, scoped, tag = 'output window, operand 0, single buffered']
    %6 = vsyncpa [#allocation3], 0
    %7 = vsyncpa [#allocation4], 0
    // Predicated region
    $region2: #{tpu_custom_call.1} parent=1 // pred_check
      _
    $region3: #{tpu_custom_call.1} parent=1 // pred_check_branch
      %9 = sbr.rel (0) target = $region5
    $region4: #{tpu_custom_call.1} parent=1 // pred_region
      %s11 = ssub.s32 256, 256
      %12 = vsyncadd [#allocation3], %s11
      %s14 = sshll.u32 [#allocation2], 4
      %s15 = int_to_ptr.vmem [resolvable:$true] %s14
      %17 = dma.hbm_to_vmem [thread:$0]  %s0, 256, %s15, [#allocation3]
    $region5: #{tpu_custom_call.1} parent=1 // pred_fallthru
      _
    // Predicated region
    $region6: #{tpu_custom_call.1} parent=1 // pred_check
      _
    $region7: #{tpu_custom_call.1} parent=1 // pred_check_branch
      %19 = sbr.rel (0) target = $region9
    $region8: #{tpu_custom_call.1} parent=1 // pred_region
      %20 = dma.done [#allocation3], 256
    $region9: #{tpu_custom_call.1} parent=1 // pred_fallthru
      _
    %v21 = vld [vmem:[#allocation2] sm:$0xff]
    %v22 = vld [vmem:[#allocation2 + $0x8] sm:$0xff]
    %v23 = vtanh.pop %v21
    %v24 = vtanh.pop %v22
    %25 = vst [vmem:[#allocation5] sm:$0xff] %v23
    %26 = vst [vmem:[#allocation5 + $0x8] sm:$0xff] %v24
    // Predicated region
    $region10: #{tpu_custom_call.1} parent=1 // pred_check
      _
    $region11: #{tpu_custom_call.1} parent=1 // pred_check_branch
      %28 = sbr.rel (0) target = $region13
    $region12: #{tpu_custom_call.1} parent=1 // pred_region
      %s30 = ssub.s32 256, 256
      %31 = vsyncadd [#allocation4], %s30
      %s33 = sshll.u32 [#allocation5], 4
      %s34 = int_to_ptr.vmem [resolvable:$true] %s33
      %36 = dma.vmem_to_hbm [thread:$0]  %s34, 256, %s1, [#allocation4]
    $region13: #{tpu_custom_call.1} parent=1 // pred_fallthru
      _
    // Predicated region
    $region14: #{tpu_custom_call.1} parent=1 // pred_check
      _
    $region15: #{tpu_custom_call.1} parent=1 // pred_check_branch
      %38 = sbr.rel (0) target = $region17
    $region16: #{tpu_custom_call.1} parent=1 // pred_region
      %39 = dma.done [#allocation4], 256
    $region17: #{tpu_custom_call.1} parent=1 // pred_fallthru
      _
    %40 = vsyncpa [#allocation3], 1
    %41 = vsyncpa [#allocation4], 1

</llo_original>
